<compile_context>
chip_gen: v7x
topology: tpu7x:2x2x1
jax: 0.10.0
libtpu: 0.0.40
codegen_flags: <defaults>
</compile_context>

<pallas_src>
import functools

import jax
import jax.numpy as jnp
from jax.experimental import pallas as pl
from jax.experimental.pallas import tpu as pltpu


# ------------------------------ Pallas kernel --------------------------------

def _channel_mix(acc, a, w):
    """acc += a @ w via VPU broadcast-FMAs.  a: (M, K), w: (K, Cout), K tiny."""
    for k in range(w.shape[0]):                      # static, fully unrolled (K <= 4)
        acc = acc + a[:, k:k + 1] * w[k:k + 1, :]
    return acc


def _multiconv_kernel(x_ref, w_ref, o_ref, *, c1, cg, c2):
    """Whole MultiConv chain fused; only 2 input operands (pixels + packed slab).

    x_ref : (N, c1, H*W)  NCHW input with spatial flattened; on the module's valid
                          domain only pixel (0,0) feeds the stride-2 1x1 conv.
    w_ref : (5 + c1 + 7*cg, c2) packed folded conv+BN centre-tap weights & biases:
              rows 0..3            : b1 b2 b3 b4   (cols :cg, rest zero-padded)
              row  4               : b5            (cols :c2)
              rows 5 .. 5+c1-1     : w1            (cols :cg)
              next 3*cg rows       : w2, w3, w4    (cols :cg)
              last 4*cg rows       : w5, rows grouped per concat source [r1|r2|r3|r4]
    o_ref : (N, c2)
    """
    n = x_ref.shape[0]

    # In-kernel pixel-(0,0) extraction (review item: no separate host slice/launch).
    p = x_ref[...][:, :, 0]                          # (N, c1)

    slab = w_ref[...]                                # single packed weight operand
    b1 = slab[0:1, :cg]
    b2 = slab[1:2, :cg]
    b3 = slab[2:3, :cg]
    b4 = slab[3:4, :cg]
    b5 = slab[4:5, :c2]
    r = 5
    w1 = slab[r:r + c1, :cg]; r += c1
    w2 = slab[r:r + cg, :cg]; r += cg
    w3 = slab[r:r + cg, :cg]; r += cg
    w4 = slab[r:r + cg, :cg]; r += cg
    w5 = slab[r:r + 4 * cg, :c2]

    def conv_bn_silu(a, w, b):
        acc = _channel_mix(jnp.broadcast_to(b, (n, w.shape[1])), a, w)
        return acc * jax.nn.sigmoid(acc)             # exact SiLU, f32

    r1 = conv_bn_silu(p, w1, b1)                     # cov1x1_2 (k=1, s=2)
    r2 = conv_bn_silu(r1, w2, b2)                    # cov3x3_1
    r3 = conv_bn_silu(r2, w3, b3)                    # cov3x3_2
    r4 = conv_bn_silu(r3, w4, b4)                    # cov3x3_3

    # cov3x3_4 over cat([r1, r2, r3, r4], channel): weight split per concat source,
    # so the concat is never materialized.
    acc = jnp.broadcast_to(b5, (n, c2))
    acc = _channel_mix(acc, r1, w5[0 * cg:1 * cg, :])
    acc = _channel_mix(acc, r2, w5[1 * cg:2 * cg, :])
    acc = _channel_mix(acc, r3, w5[2 * cg:3 * cg, :])
    acc = _channel_mix(acc, r4, w5[3 * cg:4 * cg, :])
    o_ref[...] = (acc * jax.nn.sigmoid(acc)).astype(o_ref.dtype)


# --------------------------- parameters & folding ----------------------------

def init_conv_bn(key, cin, cout, k):
    """Raw Conv2d(bias=False) weight (HWIO) + eval-mode BatchNorm2d stats."""
    kw, kg, kb, km, kv = jax.random.split(key, 5)
    return {
        "w": jax.random.normal(kw, (k, k, cin, cout), jnp.float32) * 0.1,
        "gamma": 1.0 + 0.1 * jax.random.normal(kg, (cout,), jnp.float32),
        "beta": 0.1 * jax.random.normal(kb, (cout,), jnp.float32),
        "mean": 0.1 * jax.random.normal(km, (cout,), jnp.float32),
        "var": jnp.abs(jax.random.normal(kv, (cout,), jnp.float32)) + 1.0,
    }


def _fold_conv_bn_center(p, eps=1e-5):
    """Fold BN into the conv and keep the only tap that can touch real data.

    On the module's valid domain every map entering a 3x3 conv is 1x1, so with
    padding=1 all taps except the centre (1,1) multiply zero padding; the 1x1
    conv's single tap is its own centre.
    """
    scale = p["gamma"] / jnp.sqrt(p["var"] + eps)            # (cout,)
    w = p["w"] * scale                                        # (k,k,cin,cout)
    k = w.shape[0]
    w_center = w[k // 2, k // 2]                              # (cin, cout)
    b = p["beta"] - p["mean"] * scale
    return w_center, b.reshape(1, -1)


def fold_multiconv_params(params, eps=1e-5):
    """Fold BN + pack all weights/biases into one contiguous f32 slab.

    Call ONCE at setup time (eagerly, outside jit): keeps the fold/pack off the
    per-forward critical path (review item 3) and collapses 10 tiny DMA operands
    into a single (R, c2) slab (review item 1).
    """
    w1, b1 = _fold_conv_bn_center(params["cov1x1_2"], eps)   # (c1, cg), (1, cg)
    w2, b2 = _fold_conv_bn_center(params["cov3x3_1"], eps)
    w3, b3 = _fold_conv_bn_center(params["cov3x3_2"], eps)
    w4, b4 = _fold_conv_bn_center(params["cov3x3_3"], eps)
    w5, b5 = _fold_conv_bn_center(params["cov3x3_4"], eps)   # (4*cg, c2), (1, c2)

    c1, cg = w1.shape
    c2 = w5.shape[1]
    assert w5.shape[0] == 4 * cg and c2 == 8 * cg and c1 == cg

    def pad_cols(a):
        return jnp.pad(a, ((0, 0), (0, c2 - a.shape[1])))

    slab = jnp.concatenate(
        [pad_cols(b1), pad_cols(b2), pad_cols(b3), pad_cols(b4), b5,
         pad_cols(w1), pad_cols(w2), pad_cols(w3), pad_cols(w4), w5],
        axis=0).astype(jnp.float32)                           # (5 + c1 + 7*cg, c2)
    return jax.device_put(slab)


# -------------------------------- forward ------------------------------------

def multiconv_forward(x, packed):
    """x: (N, c1, H, W) NCHW; packed: slab from fold_multiconv_params."""
    n, c1, h, w_sp = x.shape
    c2 = packed.shape[1]
    cg = c2 // 8
    assert c1 == cg, "module requires c1 == c2 // 8"
    assert packed.shape[0] == 5 + c1 + 7 * cg, "packed slab layout mismatch"
    # torch.cat in forward() requires equal spatial sizes across the stride-2
    # pyramid, which forces H, W <= 2 (all intermediate maps are 1x1).
    assert h <= 2 and w_sp <= 2, "MultiConv's torch.cat only succeeds for H, W <= 2"

    # Free bitcast reshape (contiguous NCHW); pixel extraction happens in-kernel.
    x3 = x.reshape(n, c1, h * w_sp)

    out = pl.pallas_call(
        functools.partial(_multiconv_kernel, c1=c1, cg=cg, c2=c2),
        out_shape=jax.ShapeDtypeStruct((n, c2), x.dtype),
        # Whole problem is a few KB: gridless single invocation, both operands fully
        # VMEM-resident (no per-step pipeline overhead, no tiling needed on any chip;
        # footprint is tens of KiB vs the 32 MiB scoped VMEM default).
        in_specs=[pl.BlockSpec(memory_space=pltpu.MemorySpace.VMEM)] * 2,
        out_specs=pl.BlockSpec(memory_space=pltpu.MemorySpace.VMEM),
    )(x3, packed)

    return out.reshape(n, c2, 1, 1)        # NCHW output (H = W = 1), no transpose


# ---------------------- pure-JAX reference (for checking) --------------------

def _conv_bn_silu_ref(x, p, stride, eps=1e-5):
    k = p["w"].shape[0]
    pad = k // 2
    y = jax.lax.conv_general_dilated(
        x, p["w"], window_strides=(stride, stride),
        padding=((pad, pad), (pad, pad)),
        dimension_numbers=("NCHW", "HWIO", "NCHW"))
    scale = (p["gamma"] / jnp.sqrt(p["var"] + eps)).reshape(1, -1, 1, 1)
    shift = (p["beta"] - p["mean"] * p["gamma"] / jnp.sqrt(p["var"] + eps)).reshape(1, -1, 1, 1)
    y = y * scale + shift
    return y * jax.nn.sigmoid(y)


def multiconv_reference(x, params):
    """Literal transcription of MultiConv.forward (pure XLA, full convs)."""
    r1 = _conv_bn_silu_ref(x, params["cov1x1_2"], stride=2)
    r2 = _conv_bn_silu_ref(r1, params["cov3x3_1"], stride=2)
    r3 = _conv_bn_silu_ref(r2, params["cov3x3_2"], stride=2)
    r4 = _conv_bn_silu_ref(r3, params["cov3x3_3"], stride=2)
    cat = jnp.concatenate([r1, r2, r3, r4], axis=1)
    return _conv_bn_silu_ref(cat, params["cov3x3_4"], stride=1)


# ----------------------------------- main -------------------------------------

if __name__ == "__main__":
    key = jax.random.PRNGKey(0)
    c1, c2 = 4, 32            # c1 == c2 // 8, required by the module definition
    N, H, W = 2, 2, 2         # H, W <= 2 required for the reference torch.cat to succeed

    ks = jax.random.split(key, 6)
    params = {
        "cov1x1_2": init_conv_bn(ks[0], c1, c2 // 8, 1),
        "cov3x3_1": init_conv_bn(ks[1], c2 // 8, c2 // 8, 3),
        "cov3x3_2": init_conv_bn(ks[2], c2 // 8, c2 // 8, 3),
        "cov3x3_3": init_conv_bn(ks[3], c2 // 8, c2 // 8, 3),
        "cov3x3_4": init_conv_bn(ks[4], c2 // 2, c2, 3),
    }
    x = jax.random.normal(ks[5], (N, c1, H, W), jnp.float32)

    # Fold + pack ONCE, eagerly, outside jit (review item 3).
    packed = fold_multiconv_params(params)

    fwd = jax.jit(multiconv_forward)
    out = fwd(x, packed)
    jax.block_until_ready(out)

    ref = jax.jit(functools.partial(multiconv_reference, params=params))(x)
    jax.block_until_ready(ref)

    assert out.shape == (N, c2, 1, 1)
    assert ref.shape == (N, c2, 1, 1)
    assert bool(jnp.isfinite(out).all())
    assert bool(jnp.allclose(out, ref, rtol=1e-4, atol=1e-5)), "mismatch vs lax.conv reference"

    print("KERNEL_OK")
</pallas_src>

<mosaic_0001>
module attributes {stable_mosaic.version = 11 : i64} {
  func.func @_multiconv_kernel(%arg0: memref<2x4x4xf32, #tpu.memory_space<vmem>>, %arg1: memref<37x32xf32, #tpu.memory_space<vmem>>, %arg2: memref<2x32xf32, #tpu.memory_space<vmem>>) attributes {dimension_semantics = [], scalar_prefetch = 0 : i64, scratch_operands = 0 : i64, tpu.core_type = #tpu.core_type<tc>} {
    %c0 = arith.constant 0 : index
    %c0_0 = arith.constant 0 : index
    %c0_1 = arith.constant 0 : index
    %0 = vector.load %arg0[%c0, %c0_0, %c0_1] : memref<2x4x4xf32, #tpu.memory_space<vmem>>, vector<2x4x4xf32>
    %1 = vector.extract_strided_slice %0 {offsets = [0, 0, 0], sizes = [2, 4, 1], strides = [1, 1, 1]} : vector<2x4x4xf32> to vector<2x4x1xf32>
    %2 = vector.shape_cast %1 : vector<2x4x1xf32> to vector<2x4xf32>
    %c0_2 = arith.constant 0 : index
    %c0_3 = arith.constant 0 : index
    %3 = vector.load %arg1[%c0_2, %c0_3] : memref<37x32xf32, #tpu.memory_space<vmem>>, vector<37x32xf32>
    %4 = vector.extract_strided_slice %3 {offsets = [0, 0], sizes = [1, 4], strides = [1, 1]} : vector<37x32xf32> to vector<1x4xf32>
    %5 = vector.extract_strided_slice %3 {offsets = [1, 0], sizes = [1, 4], strides = [1, 1]} : vector<37x32xf32> to vector<1x4xf32>
    %6 = vector.extract_strided_slice %3 {offsets = [2, 0], sizes = [1, 4], strides = [1, 1]} : vector<37x32xf32> to vector<1x4xf32>
    %7 = vector.extract_strided_slice %3 {offsets = [3, 0], sizes = [1, 4], strides = [1, 1]} : vector<37x32xf32> to vector<1x4xf32>
    %8 = vector.extract_strided_slice %3 {offsets = [4, 0], sizes = [1, 32], strides = [1, 1]} : vector<37x32xf32> to vector<1x32xf32>
    %9 = vector.extract_strided_slice %3 {offsets = [5, 0], sizes = [4, 4], strides = [1, 1]} : vector<37x32xf32> to vector<4x4xf32>
    %10 = vector.extract_strided_slice %3 {offsets = [9, 0], sizes = [4, 4], strides = [1, 1]} : vector<37x32xf32> to vector<4x4xf32>
    %11 = vector.extract_strided_slice %3 {offsets = [13, 0], sizes = [4, 4], strides = [1, 1]} : vector<37x32xf32> to vector<4x4xf32>
    %12 = vector.extract_strided_slice %3 {offsets = [17, 0], sizes = [4, 4], strides = [1, 1]} : vector<37x32xf32> to vector<4x4xf32>
    %13 = vector.extract_strided_slice %3 {offsets = [21, 0], sizes = [16, 32], strides = [1, 1]} : vector<37x32xf32> to vector<16x32xf32>
    %14 = vector.shape_cast %4 : vector<1x4xf32> to vector<1x4xf32>
    %15 = vector.broadcast %14 : vector<1x4xf32> to vector<2x4xf32>
    %16 = vector.extract_strided_slice %2 {offsets = [0, 0], sizes = [2, 1], strides = [1, 1]} : vector<2x4xf32> to vector<2x1xf32>
    %17 = vector.extract_strided_slice %9 {offsets = [0, 0], sizes = [1, 4], strides = [1, 1]} : vector<4x4xf32> to vector<1x4xf32>
    %18 = vector.broadcast %16 : vector<2x1xf32> to vector<2x4xf32>
    %19 = vector.broadcast %17 : vector<1x4xf32> to vector<2x4xf32>
    %20 = arith.mulf %18, %19 : vector<2x4xf32>
    %21 = arith.addf %15, %20 : vector<2x4xf32>
    %22 = vector.extract_strided_slice %2 {offsets = [0, 1], sizes = [2, 1], strides = [1, 1]} : vector<2x4xf32> to vector<2x1xf32>
    %23 = vector.extract_strided_slice %9 {offsets = [1, 0], sizes = [1, 4], strides = [1, 1]} : vector<4x4xf32> to vector<1x4xf32>
    %24 = vector.broadcast %22 : vector<2x1xf32> to vector<2x4xf32>
    %25 = vector.broadcast %23 : vector<1x4xf32> to vector<2x4xf32>
    %26 = arith.mulf %24, %25 : vector<2x4xf32>
    %27 = arith.addf %21, %26 : vector<2x4xf32>
    %28 = vector.extract_strided_slice %2 {offsets = [0, 2], sizes = [2, 1], strides = [1, 1]} : vector<2x4xf32> to vector<2x1xf32>
    %29 = vector.extract_strided_slice %9 {offsets = [2, 0], sizes = [1, 4], strides = [1, 1]} : vector<4x4xf32> to vector<1x4xf32>
    %30 = vector.broadcast %28 : vector<2x1xf32> to vector<2x4xf32>
    %31 = vector.broadcast %29 : vector<1x4xf32> to vector<2x4xf32>
    %32 = arith.mulf %30, %31 : vector<2x4xf32>
    %33 = arith.addf %27, %32 : vector<2x4xf32>
    %34 = vector.extract_strided_slice %2 {offsets = [0, 3], sizes = [2, 1], strides = [1, 1]} : vector<2x4xf32> to vector<2x1xf32>
    %35 = vector.extract_strided_slice %9 {offsets = [3, 0], sizes = [1, 4], strides = [1, 1]} : vector<4x4xf32> to vector<1x4xf32>
    %36 = vector.broadcast %34 : vector<2x1xf32> to vector<2x4xf32>
    %37 = vector.broadcast %35 : vector<1x4xf32> to vector<2x4xf32>
    %38 = arith.mulf %36, %37 : vector<2x4xf32>
    %39 = arith.addf %33, %38 : vector<2x4xf32>
    %40 = arith.negf %39 : vector<2x4xf32>
    %41 = math.exp %40 : vector<2x4xf32>
    %cst = arith.constant 1.000000e+00 : f32
    %42 = vector.broadcast %cst : f32 to vector<2x4xf32>
    %43 = arith.addf %42, %41 : vector<2x4xf32>
    %44 = arith.divf %42, %43 : vector<2x4xf32>
    %45 = arith.mulf %39, %44 : vector<2x4xf32>
    %46 = vector.shape_cast %5 : vector<1x4xf32> to vector<1x4xf32>
    %47 = vector.broadcast %46 : vector<1x4xf32> to vector<2x4xf32>
    %48 = vector.extract_strided_slice %45 {offsets = [0, 0], sizes = [2, 1], strides = [1, 1]} : vector<2x4xf32> to vector<2x1xf32>
    %49 = vector.extract_strided_slice %10 {offsets = [0, 0], sizes = [1, 4], strides = [1, 1]} : vector<4x4xf32> to vector<1x4xf32>
    %50 = vector.broadcast %48 : vector<2x1xf32> to vector<2x4xf32>
    %51 = vector.broadcast %49 : vector<1x4xf32> to vector<2x4xf32>
    %52 = arith.mulf %50, %51 : vector<2x4xf32>
    %53 = arith.addf %47, %52 : vector<2x4xf32>
    %54 = vector.extract_strided_slice %45 {offsets = [0, 1], sizes = [2, 1], strides = [1, 1]} : vector<2x4xf32> to vector<2x1xf32>
    %55 = vector.extract_strided_slice %10 {offsets = [1, 0], sizes = [1, 4], strides = [1, 1]} : vector<4x4xf32> to vector<1x4xf32>
    %56 = vector.broadcast %54 : vector<2x1xf32> to vector<2x4xf32>
    %57 = vector.broadcast %55 : vector<1x4xf32> to vector<2x4xf32>
    %58 = arith.mulf %56, %57 : vector<2x4xf32>
    %59 = arith.addf %53, %58 : vector<2x4xf32>
    %60 = vector.extract_strided_slice %45 {offsets = [0, 2], sizes = [2, 1], strides = [1, 1]} : vector<2x4xf32> to vector<2x1xf32>
    %61 = vector.extract_strided_slice %10 {offsets = [2, 0], sizes = [1, 4], strides = [1, 1]} : vector<4x4xf32> to vector<1x4xf32>
    %62 = vector.broadcast %60 : vector<2x1xf32> to vector<2x4xf32>
    %63 = vector.broadcast %61 : vector<1x4xf32> to vector<2x4xf32>
    %64 = arith.mulf %62, %63 : vector<2x4xf32>
    %65 = arith.addf %59, %64 : vector<2x4xf32>
    %66 = vector.extract_strided_slice %45 {offsets = [0, 3], sizes = [2, 1], strides = [1, 1]} : vector<2x4xf32> to vector<2x1xf32>
    %67 = vector.extract_strided_slice %10 {offsets = [3, 0], sizes = [1, 4], strides = [1, 1]} : vector<4x4xf32> to vector<1x4xf32>
    %68 = vector.broadcast %66 : vector<2x1xf32> to vector<2x4xf32>
    %69 = vector.broadcast %67 : vector<1x4xf32> to vector<2x4xf32>
    %70 = arith.mulf %68, %69 : vector<2x4xf32>
    %71 = arith.addf %65, %70 : vector<2x4xf32>
    %72 = arith.negf %71 : vector<2x4xf32>
    %73 = math.exp %72 : vector<2x4xf32>
    %cst_4 = arith.constant 1.000000e+00 : f32
    %74 = vector.broadcast %cst_4 : f32 to vector<2x4xf32>
    %75 = arith.addf %74, %73 : vector<2x4xf32>
    %76 = arith.divf %74, %75 : vector<2x4xf32>
    %77 = arith.mulf %71, %76 : vector<2x4xf32>
    %78 = vector.shape_cast %6 : vector<1x4xf32> to vector<1x4xf32>
    %79 = vector.broadcast %78 : vector<1x4xf32> to vector<2x4xf32>
    %80 = vector.extract_strided_slice %77 {offsets = [0, 0], sizes = [2, 1], strides = [1, 1]} : vector<2x4xf32> to vector<2x1xf32>
    %81 = vector.extract_strided_slice %11 {offsets = [0, 0], sizes = [1, 4], strides = [1, 1]} : vector<4x4xf32> to vector<1x4xf32>
    %82 = vector.broadcast %80 : vector<2x1xf32> to vector<2x4xf32>
    %83 = vector.broadcast %81 : vector<1x4xf32> to vector<2x4xf32>
    %84 = arith.mulf %82, %83 : vector<2x4xf32>
    %85 = arith.addf %79, %84 : vector<2x4xf32>
    %86 = vector.extract_strided_slice %77 {offsets = [0, 1], sizes = [2, 1], strides = [1, 1]} : vector<2x4xf32> to vector<2x1xf32>
    %87 = vector.extract_strided_slice %11 {offsets = [1, 0], sizes = [1, 4], strides = [1, 1]} : vector<4x4xf32> to vector<1x4xf32>
    %88 = vector.broadcast %86 : vector<2x1xf32> to vector<2x4xf32>
    %89 = vector.broadcast %87 : vector<1x4xf32> to vector<2x4xf32>
    %90 = arith.mulf %88, %89 : vector<2x4xf32>
    %91 = arith.addf %85, %90 : vector<2x4xf32>
    %92 = vector.extract_strided_slice %77 {offsets = [0, 2], sizes = [2, 1], strides = [1, 1]} : vector<2x4xf32> to vector<2x1xf32>
    %93 = vector.extract_strided_slice %11 {offsets = [2, 0], sizes = [1, 4], strides = [1, 1]} : vector<4x4xf32> to vector<1x4xf32>
    %94 = vector.broadcast %92 : vector<2x1xf32> to vector<2x4xf32>
    %95 = vector.broadcast %93 : vector<1x4xf32> to vector<2x4xf32>
    %96 = arith.mulf %94, %95 : vector<2x4xf32>
    %97 = arith.addf %91, %96 : vector<2x4xf32>
    %98 = vector.extract_strided_slice %77 {offsets = [0, 3], sizes = [2, 1], strides = [1, 1]} : vector<2x4xf32> to vector<2x1xf32>
    %99 = vector.extract_strided_slice %11 {offsets = [3, 0], sizes = [1, 4], strides = [1, 1]} : vector<4x4xf32> to vector<1x4xf32>
    %100 = vector.broadcast %98 : vector<2x1xf32> to vector<2x4xf32>
    %101 = vector.broadcast %99 : vector<1x4xf32> to vector<2x4xf32>
    %102 = arith.mulf %100, %101 : vector<2x4xf32>
    %103 = arith.addf %97, %102 : vector<2x4xf32>
    %104 = arith.negf %103 : vector<2x4xf32>
    %105 = math.exp %104 : vector<2x4xf32>
    %cst_5 = arith.constant 1.000000e+00 : f32
    %106 = vector.broadcast %cst_5 : f32 to vector<2x4xf32>
    %107 = arith.addf %106, %105 : vector<2x4xf32>
    %108 = arith.divf %106, %107 : vector<2x4xf32>
    %109 = arith.mulf %103, %108 : vector<2x4xf32>
    %110 = vector.shape_cast %7 : vector<1x4xf32> to vector<1x4xf32>
    %111 = vector.broadcast %110 : vector<1x4xf32> to vector<2x4xf32>
    %112 = vector.extract_strided_slice %109 {offsets = [0, 0], sizes = [2, 1], strides = [1, 1]} : vector<2x4xf32> to vector<2x1xf32>
    %113 = vector.extract_strided_slice %12 {offsets = [0, 0], sizes = [1, 4], strides = [1, 1]} : vector<4x4xf32> to vector<1x4xf32>
    %114 = vector.broadcast %112 : vector<2x1xf32> to vector<2x4xf32>
    %115 = vector.broadcast %113 : vector<1x4xf32> to vector<2x4xf32>
    %116 = arith.mulf %114, %115 : vector<2x4xf32>
    %117 = arith.addf %111, %116 : vector<2x4xf32>
    %118 = vector.extract_strided_slice %109 {offsets = [0, 1], sizes = [2, 1], strides = [1, 1]} : vector<2x4xf32> to vector<2x1xf32>
    %119 = vector.extract_strided_slice %12 {offsets = [1, 0], sizes = [1, 4], strides = [1, 1]} : vector<4x4xf32> to vector<1x4xf32>
    %120 = vector.broadcast %118 : vector<2x1xf32> to vector<2x4xf32>
    %121 = vector.broadcast %119 : vector<1x4xf32> to vector<2x4xf32>
    %122 = arith.mulf %120, %121 : vector<2x4xf32>
    %123 = arith.addf %117, %122 : vector<2x4xf32>
    %124 = vector.extract_strided_slice %109 {offsets = [0, 2], sizes = [2, 1], strides = [1, 1]} : vector<2x4xf32> to vector<2x1xf32>
    %125 = vector.extract_strided_slice %12 {offsets = [2, 0], sizes = [1, 4], strides = [1, 1]} : vector<4x4xf32> to vector<1x4xf32>
    %126 = vector.broadcast %124 : vector<2x1xf32> to vector<2x4xf32>
    %127 = vector.broadcast %125 : vector<1x4xf32> to vector<2x4xf32>
    %128 = arith.mulf %126, %127 : vector<2x4xf32>
    %129 = arith.addf %123, %128 : vector<2x4xf32>
    %130 = vector.extract_strided_slice %109 {offsets = [0, 3], sizes = [2, 1], strides = [1, 1]} : vector<2x4xf32> to vector<2x1xf32>
    %131 = vector.extract_strided_slice %12 {offsets = [3, 0], sizes = [1, 4], strides = [1, 1]} : vector<4x4xf32> to vector<1x4xf32>
    %132 = vector.broadcast %130 : vector<2x1xf32> to vector<2x4xf32>
    %133 = vector.broadcast %131 : vector<1x4xf32> to vector<2x4xf32>
    %134 = arith.mulf %132, %133 : vector<2x4xf32>
    %135 = arith.addf %129, %134 : vector<2x4xf32>
    %136 = arith.negf %135 : vector<2x4xf32>
    %137 = math.exp %136 : vector<2x4xf32>
    %cst_6 = arith.constant 1.000000e+00 : f32
    %138 = vector.broadcast %cst_6 : f32 to vector<2x4xf32>
    %139 = arith.addf %138, %137 : vector<2x4xf32>
    %140 = arith.divf %138, %139 : vector<2x4xf32>
    %141 = arith.mulf %135, %140 : vector<2x4xf32>
    %142 = vector.shape_cast %8 : vector<1x32xf32> to vector<1x32xf32>
    %143 = vector.broadcast %142 : vector<1x32xf32> to vector<2x32xf32>
    %144 = vector.extract_strided_slice %13 {offsets = [0, 0], sizes = [4, 32], strides = [1, 1]} : vector<16x32xf32> to vector<4x32xf32>
    %145 = vector.extract_strided_slice %45 {offsets = [0, 0], sizes = [2, 1], strides = [1, 1]} : vector<2x4xf32> to vector<2x1xf32>
    %146 = vector.extract_strided_slice %144 {offsets = [0, 0], sizes = [1, 32], strides = [1, 1]} : vector<4x32xf32> to vector<1x32xf32>
    %147 = vector.broadcast %145 : vector<2x1xf32> to vector<2x32xf32>
    %148 = vector.broadcast %146 : vector<1x32xf32> to vector<2x32xf32>
    %149 = arith.mulf %147, %148 : vector<2x32xf32>
    %150 = arith.addf %143, %149 : vector<2x32xf32>
    %151 = vector.extract_strided_slice %45 {offsets = [0, 1], sizes = [2, 1], strides = [1, 1]} : vector<2x4xf32> to vector<2x1xf32>
    %152 = vector.extract_strided_slice %144 {offsets = [1, 0], sizes = [1, 32], strides = [1, 1]} : vector<4x32xf32> to vector<1x32xf32>
    %153 = vector.broadcast %151 : vector<2x1xf32> to vector<2x32xf32>
    %154 = vector.broadcast %152 : vector<1x32xf32> to vector<2x32xf32>
    %155 = arith.mulf %153, %154 : vector<2x32xf32>
    %156 = arith.addf %150, %155 : vector<2x32xf32>
    %157 = vector.extract_strided_slice %45 {offsets = [0, 2], sizes = [2, 1], strides = [1, 1]} : vector<2x4xf32> to vector<2x1xf32>
    %158 = vector.extract_strided_slice %144 {offsets = [2, 0], sizes = [1, 32], strides = [1, 1]} : vector<4x32xf32> to vector<1x32xf32>
    %159 = vector.broadcast %157 : vector<2x1xf32> to vector<2x32xf32>
    %160 = vector.broadcast %158 : vector<1x32xf32> to vector<2x32xf32>
    %161 = arith.mulf %159, %160 : vector<2x32xf32>
    %162 = arith.addf %156, %161 : vector<2x32xf32>
    %163 = vector.extract_strided_slice %45 {offsets = [0, 3], sizes = [2, 1], strides = [1, 1]} : vector<2x4xf32> to vector<2x1xf32>
    %164 = vector.extract_strided_slice %144 {offsets = [3, 0], sizes = [1, 32], strides = [1, 1]} : vector<4x32xf32> to vector<1x32xf32>
    %165 = vector.broadcast %163 : vector<2x1xf32> to vector<2x32xf32>
    %166 = vector.broadcast %164 : vector<1x32xf32> to vector<2x32xf32>
    %167 = arith.mulf %165, %166 : vector<2x32xf32>
    %168 = arith.addf %162, %167 : vector<2x32xf32>
    %169 = vector.extract_strided_slice %13 {offsets = [4, 0], sizes = [4, 32], strides = [1, 1]} : vector<16x32xf32> to vector<4x32xf32>
    %170 = vector.extract_strided_slice %77 {offsets = [0, 0], sizes = [2, 1], strides = [1, 1]} : vector<2x4xf32> to vector<2x1xf32>
    %171 = vector.extract_strided_slice %169 {offsets = [0, 0], sizes = [1, 32], strides = [1, 1]} : vector<4x32xf32> to vector<1x32xf32>
    %172 = vector.broadcast %170 : vector<2x1xf32> to vector<2x32xf32>
    %173 = vector.broadcast %171 : vector<1x32xf32> to vector<2x32xf32>
    %174 = arith.mulf %172, %173 : vector<2x32xf32>
    %175 = arith.addf %168, %174 : vector<2x32xf32>
    %176 = vector.extract_strided_slice %77 {offsets = [0, 1], sizes = [2, 1], strides = [1, 1]} : vector<2x4xf32> to vector<2x1xf32>
    %177 = vector.extract_strided_slice %169 {offsets = [1, 0], sizes = [1, 32], strides = [1, 1]} : vector<4x32xf32> to vector<1x32xf32>
    %178 = vector.broadcast %176 : vector<2x1xf32> to vector<2x32xf32>
    %179 = vector.broadcast %177 : vector<1x32xf32> to vector<2x32xf32>
    %180 = arith.mulf %178, %179 : vector<2x32xf32>
    %181 = arith.addf %175, %180 : vector<2x32xf32>
    %182 = vector.extract_strided_slice %77 {offsets = [0, 2], sizes = [2, 1], strides = [1, 1]} : vector<2x4xf32> to vector<2x1xf32>
    %183 = vector.extract_strided_slice %169 {offsets = [2, 0], sizes = [1, 32], strides = [1, 1]} : vector<4x32xf32> to vector<1x32xf32>
    %184 = vector.broadcast %182 : vector<2x1xf32> to vector<2x32xf32>
    %185 = vector.broadcast %183 : vector<1x32xf32> to vector<2x32xf32>
    %186 = arith.mulf %184, %185 : vector<2x32xf32>
    %187 = arith.addf %181, %186 : vector<2x32xf32>
    %188 = vector.extract_strided_slice %77 {offsets = [0, 3], sizes = [2, 1], strides = [1, 1]} : vector<2x4xf32> to vector<2x1xf32>
    %189 = vector.extract_strided_slice %169 {offsets = [3, 0], sizes = [1, 32], strides = [1, 1]} : vector<4x32xf32> to vector<1x32xf32>
    %190 = vector.broadcast %188 : vector<2x1xf32> to vector<2x32xf32>
    %191 = vector.broadcast %189 : vector<1x32xf32> to vector<2x32xf32>
    %192 = arith.mulf %190, %191 : vector<2x32xf32>
    %193 = arith.addf %187, %192 : vector<2x32xf32>
    %194 = vector.extract_strided_slice %13 {offsets = [8, 0], sizes = [4, 32], strides = [1, 1]} : vector<16x32xf32> to vector<4x32xf32>
    %195 = vector.extract_strided_slice %109 {offsets = [0, 0], sizes = [2, 1], strides = [1, 1]} : vector<2x4xf32> to vector<2x1xf32>
    %196 = vector.extract_strided_slice %194 {offsets = [0, 0], sizes = [1, 32], strides = [1, 1]} : vector<4x32xf32> to vector<1x32xf32>
    %197 = vector.broadcast %195 : vector<2x1xf32> to vector<2x32xf32>
    %198 = vector.broadcast %196 : vector<1x32xf32> to vector<2x32xf32>
    %199 = arith.mulf %197, %198 : vector<2x32xf32>
    %200 = arith.addf %193, %199 : vector<2x32xf32>
    %201 = vector.extract_strided_slice %109 {offsets = [0, 1], sizes = [2, 1], strides = [1, 1]} : vector<2x4xf32> to vector<2x1xf32>
    %202 = vector.extract_strided_slice %194 {offsets = [1, 0], sizes = [1, 32], strides = [1, 1]} : vector<4x32xf32> to vector<1x32xf32>
    %203 = vector.broadcast %201 : vector<2x1xf32> to vector<2x32xf32>
    %204 = vector.broadcast %202 : vector<1x32xf32> to vector<2x32xf32>
    %205 = arith.mulf %203, %204 : vector<2x32xf32>
    %206 = arith.addf %200, %205 : vector<2x32xf32>
    %207 = vector.extract_strided_slice %109 {offsets = [0, 2], sizes = [2, 1], strides = [1, 1]} : vector<2x4xf32> to vector<2x1xf32>
    %208 = vector.extract_strided_slice %194 {offsets = [2, 0], sizes = [1, 32], strides = [1, 1]} : vector<4x32xf32> to vector<1x32xf32>
    %209 = vector.broadcast %207 : vector<2x1xf32> to vector<2x32xf32>
    %210 = vector.broadcast %208 : vector<1x32xf32> to vector<2x32xf32>
    %211 = arith.mulf %209, %210 : vector<2x32xf32>
    %212 = arith.addf %206, %211 : vector<2x32xf32>
    %213 = vector.extract_strided_slice %109 {offsets = [0, 3], sizes = [2, 1], strides = [1, 1]} : vector<2x4xf32> to vector<2x1xf32>
    %214 = vector.extract_strided_slice %194 {offsets = [3, 0], sizes = [1, 32], strides = [1, 1]} : vector<4x32xf32> to vector<1x32xf32>
    %215 = vector.broadcast %213 : vector<2x1xf32> to vector<2x32xf32>
    %216 = vector.broadcast %214 : vector<1x32xf32> to vector<2x32xf32>
    %217 = arith.mulf %215, %216 : vector<2x32xf32>
    %218 = arith.addf %212, %217 : vector<2x32xf32>
    %219 = vector.extract_strided_slice %13 {offsets = [12, 0], sizes = [4, 32], strides = [1, 1]} : vector<16x32xf32> to vector<4x32xf32>
    %220 = vector.extract_strided_slice %141 {offsets = [0, 0], sizes = [2, 1], strides = [1, 1]} : vector<2x4xf32> to vector<2x1xf32>
    %221 = vector.extract_strided_slice %219 {offsets = [0, 0], sizes = [1, 32], strides = [1, 1]} : vector<4x32xf32> to vector<1x32xf32>
    %222 = vector.broadcast %220 : vector<2x1xf32> to vector<2x32xf32>
    %223 = vector.broadcast %221 : vector<1x32xf32> to vector<2x32xf32>
    %224 = arith.mulf %222, %223 : vector<2x32xf32>
    %225 = arith.addf %218, %224 : vector<2x32xf32>
    %226 = vector.extract_strided_slice %141 {offsets = [0, 1], sizes = [2, 1], strides = [1, 1]} : vector<2x4xf32> to vector<2x1xf32>
    %227 = vector.extract_strided_slice %219 {offsets = [1, 0], sizes = [1, 32], strides = [1, 1]} : vector<4x32xf32> to vector<1x32xf32>
    %228 = vector.broadcast %226 : vector<2x1xf32> to vector<2x32xf32>
    %229 = vector.broadcast %227 : vector<1x32xf32> to vector<2x32xf32>
    %230 = arith.mulf %228, %229 : vector<2x32xf32>
    %231 = arith.addf %225, %230 : vector<2x32xf32>
    %232 = vector.extract_strided_slice %141 {offsets = [0, 2], sizes = [2, 1], strides = [1, 1]} : vector<2x4xf32> to vector<2x1xf32>
    %233 = vector.extract_strided_slice %219 {offsets = [2, 0], sizes = [1, 32], strides = [1, 1]} : vector<4x32xf32> to vector<1x32xf32>
    %234 = vector.broadcast %232 : vector<2x1xf32> to vector<2x32xf32>
    %235 = vector.broadcast %233 : vector<1x32xf32> to vector<2x32xf32>
    %236 = arith.mulf %234, %235 : vector<2x32xf32>
    %237 = arith.addf %231, %236 : vector<2x32xf32>
    %238 = vector.extract_strided_slice %141 {offsets = [0, 3], sizes = [2, 1], strides = [1, 1]} : vector<2x4xf32> to vector<2x1xf32>
    %239 = vector.extract_strided_slice %219 {offsets = [3, 0], sizes = [1, 32], strides = [1, 1]} : vector<4x32xf32> to vector<1x32xf32>
    %240 = vector.broadcast %238 : vector<2x1xf32> to vector<2x32xf32>
    %241 = vector.broadcast %239 : vector<1x32xf32> to vector<2x32xf32>
    %242 = arith.mulf %240, %241 : vector<2x32xf32>
    %243 = arith.addf %237, %242 : vector<2x32xf32>
    %244 = arith.negf %243 : vector<2x32xf32>
    %245 = math.exp %244 : vector<2x32xf32>
    %cst_7 = arith.constant 1.000000e+00 : f32
    %246 = vector.broadcast %cst_7 : f32 to vector<2x32xf32>
    %247 = arith.addf %246, %245 : vector<2x32xf32>
    %248 = arith.divf %246, %247 : vector<2x32xf32>
    %249 = arith.mulf %243, %248 : vector<2x32xf32>
    %c0_8 = arith.constant 0 : index
    %c0_9 = arith.constant 0 : index
    %250 = vector.load %arg2[%c0_8, %c0_9] : memref<2x32xf32, #tpu.memory_space<vmem>>, vector<2x32xf32>
    tpu.vector_store %arg2[%c0_8, %c0_9], %249 {strides = array<i32>} : memref<2x32xf32, #tpu.memory_space<vmem>>, vector<2x32xf32>,
    return
  }
}

</mosaic_0001>

<llo_original>
// kernel: multiconv_forward.1
$region0: #{multiconv_forward.1}
  #allocation0 [shape = 'u32[]', space=smem, size = 0x4, offset = 0x4, fixed_abs, tag = 'smem constant byte address 0x4 - core index']
  #allocation1 [shape = 'u32[144,128]{1,0:T(1,128)}', space=vmem, size = 0x12000, scoped, tag = 'internal scratch']
  %s0 = inlined_call_operand.vmem [shape: f32[2,4,4], index: 0, kind: input, shape index: {}]
  %s1 = inlined_call_operand.vmem [shape: f32[37,32], index: 1, kind: input, shape index: {}]
  %s2 = inlined_call_operand.hbm [shape: f32[2,32], index: 2, kind: output, shape index: {}]
  %s3 = sld [smem:[#allocation0]]
  $region18: #{multiconv_forward.1} parent=0
    _
  %s5 = ssub.s32 1, %s3
  %s6 = scalar_select 0, %s5, %s3
  $region1: #{multiconv_forward.1} parent=0
    #allocation2 [shape = 'u8[1024]{0}', space=vmem, size = 0x400, scoped, tag = 'output window, operand 0, single buffered']
    #allocation3 [shape = 's32[1]{0}', space=sflag, size = 0x4, scoped, tag = 'scoped memory for multiconv_forward.1']
    %7 = vsyncpa [#allocation3], 0
    // Predicated region
    $region2: #{multiconv_forward.1} parent=1 // pred_check
      _
    $region3: #{multiconv_forward.1} parent=1 // pred_check_branch
      %9 = sbr.rel (0) target = $region5
    $region4: #{multiconv_forward.1} parent=1 // pred_region
      _
    $region5: #{multiconv_forward.1} parent=1 // pred_fallthru
      _
    // Predicated region
    $region6: #{multiconv_forward.1} parent=1 // pred_check
      _
    $region7: #{multiconv_forward.1} parent=1 // pred_check_branch
      %11 = sbr.rel (0) target = $region9
    $region8: #{multiconv_forward.1} parent=1 // pred_region
      _
    $region9: #{multiconv_forward.1} parent=1 // pred_fallthru
      _
    %v12 = vld [vmem:[%s0] sm:$0xf]
    %v13 = vld [vmem:[%s0 + $0x4] sm:$0xf]
    %v14 = vld [vmem:[%s1] sm:$0xff]
    %v15 = vld [vmem:[%s1 + $0x8] sm:$0xff]
    %v16 = vld [vmem:[%s1 + $0x10] sm:$0xff]
    %v17 = vld [vmem:[%s1 + $0x18] sm:$0xff]
    %v18 = vld [vmem:[%s1 + $0x20] sm:$0x1f]
    %v19 = vlaneseq
    %v20 = vshrl.u32 %v19, 7
    %v21 = vsub.s32 0, %v20
    %v22 = vrot.slane %v14, %v21
    %v23 = vlaneseq
    %v24 = vshrl.u32 %v23, 7
    %v25 = vsub.s32 0, %v24
    %v26 = vrot.slane %v12, %v25
    %v27 = vlaneseq
    %v28 = vshrl.u32 %v27, 7
    %v29 = vsub.s32 0, %v28
    %v30 = vrot.slane %v13, %v29
    %v31 = vlaneseq
    %v32 = vshrl.u32 %v31, 7
    %v33 = vsub.s32 5, %v32
    %v34 = vrot.slane %v14, %v33
    %37 = vbcast.lane.b32.xlu0 %v34, 256
    %v38 = vpop.permute.xlu0 %37
    %v40 = vmul.f32 %v26, %v38
    %v41 = vmul.f32 %v30, %v38
    %44 = vset.pattern.permute.xlu0 0
    %45 = vperm.xlu0 %44, %v40
    %v46 = vpop.permute.xlu0 %45
    %47 = vset.pattern.permute.xlu0 0
    %48 = vperm.xlu0 %47, %v41
    %v49 = vpop.permute.xlu0 %48
    %v50 = vlaneseq
    %v51 = vand.u32 %v50, 127
    %v52 = vlaneseq
    %v53 = vshrl.u32 %v52, 7
    %v54 = vsub.s32 %v51, %v53
    %v55 = vrot.slane %v46, %v54
    %v56 = vlaneseq
    %v57 = vshrl.u32 %v56, 7
    %v58 = vsub.s32 %v51, %v57
    %v59 = vrot.slane %v49, %v58
    %vm60 = vcmask 1041409
    %v61 = vsel %vm60, %v59, %v55
    %v63 = vadd.f32 %v22, %v61
    %v64 = vlaneseq
    %v65 = vshrl.u32 %v64, 7
    %v66 = vsub.s32 1, %v65
    %v67 = vrot.slane %v12, %v66
    %v68 = vlaneseq
    %v69 = vshrl.u32 %v68, 7
    %v70 = vsub.s32 1, %v69
    %v71 = vrot.slane %v13, %v70
    %v72 = vlaneseq
    %v73 = vshrl.u32 %v72, 7
    %v74 = vsub.s32 6, %v73
    %v75 = vrot.slane %v14, %v74
    %78 = vbcast.lane.b32.xlu0 %v75, 256
    %v79 = vpop.permute.xlu0 %78
    %v81 = vmul.f32 %v67, %v79
    %v82 = vmul.f32 %v71, %v79
    %85 = vset.pattern.permute.xlu0 0
    %86 = vperm.xlu0 %85, %v81
    %v87 = vpop.permute.xlu0 %86
    %88 = vset.pattern.permute.xlu0 0
    %89 = vperm.xlu0 %88, %v82
    %v90 = vpop.permute.xlu0 %89
    %v91 = vlaneseq
    %v92 = vshrl.u32 %v91, 7
    %v93 = vsub.s32 %v51, %v92
    %v94 = vrot.slane %v87, %v93
    %v95 = vlaneseq
    %v96 = vshrl.u32 %v95, 7
    %v97 = vsub.s32 %v51, %v96
    %v98 = vrot.slane %v90, %v97
    %v99 = vsel %vm60, %v98, %v94
    %v101 = vadd.f32 %v63, %v99
    %v102 = vlaneseq
    %v103 = vshrl.u32 %v102, 7
    %v104 = vsub.s32 2, %v103
    %v105 = vrot.slane %v12, %v104
    %v106 = vlaneseq
    %v107 = vshrl.u32 %v106, 7
    %v108 = vsub.s32 2, %v107
    %v109 = vrot.slane %v13, %v108
    %v110 = vlaneseq
    %v111 = vshrl.u32 %v110, 7
    %v112 = vsub.s32 7, %v111
    %v113 = vrot.slane %v14, %v112
    %116 = vbcast.lane.b32.xlu0 %v113, 256
    %v117 = vpop.permute.xlu0 %116
    %v119 = vmul.f32 %v105, %v117
    %v120 = vmul.f32 %v109, %v117
    %123 = vset.pattern.permute.xlu0 0
    %124 = vperm.xlu0 %123, %v119
    %v125 = vpop.permute.xlu0 %124
    %126 = vset.pattern.permute.xlu0 0
    %127 = vperm.xlu0 %126, %v120
    %v128 = vpop.permute.xlu0 %127
    %v129 = vlaneseq
    %v130 = vshrl.u32 %v129, 7
    %v131 = vsub.s32 %v51, %v130
    %v132 = vrot.slane %v125, %v131
    %v133 = vlaneseq
    %v134 = vshrl.u32 %v133, 7
    %v135 = vsub.s32 %v51, %v134
    %v136 = vrot.slane %v128, %v135
    %v137 = vsel %vm60, %v136, %v132
    %v139 = vadd.f32 %v101, %v137
    %v140 = vlaneseq
    %v141 = vshrl.u32 %v140, 7
    %v142 = vsub.s32 3, %v141
    %v143 = vrot.slane %v12, %v142
    %v144 = vlaneseq
    %v145 = vshrl.u32 %v144, 7
    %v146 = vsub.s32 3, %v145
    %v147 = vrot.slane %v13, %v146
    %v148 = vlaneseq
    %v149 = vshrl.u32 %v148, 7
    %v150 = vsub.s32 0, %v149
    %v151 = vrot.slane %v15, %v150
    %154 = vbcast.lane.b32.xlu0 %v151, 256
    %v155 = vpop.permute.xlu0 %154
    %v157 = vmul.f32 %v143, %v155
    %v158 = vmul.f32 %v147, %v155
    %161 = vset.pattern.permute.xlu0 0
    %162 = vperm.xlu0 %161, %v157
    %v163 = vpop.permute.xlu0 %162
    %164 = vset.pattern.permute.xlu0 0
    %165 = vperm.xlu0 %164, %v158
    %v166 = vpop.permute.xlu0 %165
    %v167 = vlaneseq
    %v168 = vshrl.u32 %v167, 7
    %v169 = vsub.s32 %v51, %v168
    %v170 = vrot.slane %v163, %v169
    %v171 = vlaneseq
    %v172 = vshrl.u32 %v171, 7
    %v173 = vsub.s32 %v51, %v172
    %v174 = vrot.slane %v166, %v173
    %v175 = vsel %vm60, %v174, %v170
    %v177 = vadd.f32 %v139, %v175
    %v178 = vxor.u32 %v177, 2147483648
    %v179 = vmul.f32 %v178, 1.442695
    %v180 = vpow.pop %v179
    %v181 = vadd.f32 %v180, 1.0
    %v182 = vrcp.pop %v181
    %v183 = vmul.f32 1.0, %v182
    %v184 = vmul.f32 %v177, %v183
    %v185 = vlaneseq
    %v186 = vshrl.u32 %v185, 7
    %v187 = vsub.s32 1, %v186
    %v188 = vrot.slane %v14, %v187
    %190 = vset.pattern.permute.xlu0 0
    %191 = vperm.xlu0 %190, %v184
    %v192 = vpop.permute.xlu0 %191
    %v194 = vlaneseq
    %v195 = vshrl.u32 %v194, 7
    %v196 = vsub.s32 1, %v195
    %v197 = vrot.slane %v15, %v196
    %v198 = vmul.f32 %v192, %v197
    %v199 = vadd.f32 %v188, %v198
    %200 = vset.pattern.permute.xlu0 1
    %201 = vperm.xlu0 %200, %v184
    %v202 = vpop.permute.xlu0 %201
    %v204 = vlaneseq
    %v205 = vshrl.u32 %v204, 7
    %v206 = vsub.s32 2, %v205
    %v207 = vrot.slane %v15, %v206
    %v208 = vmul.f32 %v202, %v207
    %v209 = vadd.f32 %v199, %v208
    %210 = vset.pattern.permute.xlu0 2
    %211 = vperm.xlu0 %210, %v184
    %v212 = vpop.permute.xlu0 %211
    %v214 = vlaneseq
    %v215 = vshrl.u32 %v214, 7
    %v216 = vsub.s32 3, %v215
    %v217 = vrot.slane %v15, %v216
    %v218 = vmul.f32 %v212, %v217
    %v219 = vadd.f32 %v209, %v218
    %220 = vset.pattern.permute.xlu0 3
    %221 = vperm.xlu0 %220, %v184
    %v222 = vpop.permute.xlu0 %221
    %v224 = vlaneseq
    %v225 = vshrl.u32 %v224, 7
    %v226 = vsub.s32 4, %v225
    %v227 = vrot.slane %v15, %v226
    %v228 = vmul.f32 %v222, %v227
    %v229 = vadd.f32 %v219, %v228
    %v230 = vxor.u32 %v229, 2147483648
    %v231 = vmul.f32 %v230, 1.442695
    %v232 = vpow.pop %v231
    %v233 = vadd.f32 %v232, 1.0
    %v234 = vrcp.pop %v233
    %v235 = vmul.f32 1.0, %v234
    %v236 = vmul.f32 %v229, %v235
    %v237 = vlaneseq
    %v238 = vshrl.u32 %v237, 7
    %v239 = vsub.s32 2, %v238
    %v240 = vrot.slane %v14, %v239
    %242 = vset.pattern.permute.xlu0 0
    %243 = vperm.xlu0 %242, %v236
    %v244 = vpop.permute.xlu0 %243
    %v246 = vlaneseq
    %v247 = vshrl.u32 %v246, 7
    %v248 = vsub.s32 5, %v247
    %v249 = vrot.slane %v15, %v248
    %v250 = vmul.f32 %v244, %v249
    %v251 = vadd.f32 %v240, %v250
    %252 = vset.pattern.permute.xlu0 1
    %253 = vperm.xlu0 %252, %v236
    %v254 = vpop.permute.xlu0 %253
    %v256 = vlaneseq
    %v257 = vshrl.u32 %v256, 7
    %v258 = vsub.s32 6, %v257
    %v259 = vrot.slane %v15, %v258
    %v260 = vmul.f32 %v254, %v259
    %v261 = vadd.f32 %v251, %v260
    %262 = vset.pattern.permute.xlu0 2
    %263 = vperm.xlu0 %262, %v236
    %v264 = vpop.permute.xlu0 %263
    %v266 = vlaneseq
    %v267 = vshrl.u32 %v266, 7
    %v268 = vsub.s32 7, %v267
    %v269 = vrot.slane %v15, %v268
    %v270 = vmul.f32 %v264, %v269
    %v271 = vadd.f32 %v261, %v270
    %272 = vset.pattern.permute.xlu0 3
    %273 = vperm.xlu0 %272, %v236
    %v274 = vpop.permute.xlu0 %273
    %v276 = vlaneseq
    %v277 = vshrl.u32 %v276, 7
    %v278 = vsub.s32 0, %v277
    %v279 = vrot.slane %v16, %v278
    %v280 = vmul.f32 %v274, %v279
    %v281 = vadd.f32 %v271, %v280
    %v282 = vxor.u32 %v281, 2147483648
    %v283 = vmul.f32 %v282, 1.442695
    %v284 = vpow.pop %v283
    %v285 = vadd.f32 %v284, 1.0
    %v286 = vrcp.pop %v285
    %v287 = vmul.f32 1.0, %v286
    %v288 = vmul.f32 %v281, %v287
    %v289 = vlaneseq
    %v290 = vshrl.u32 %v289, 7
    %v291 = vsub.s32 3, %v290
    %v292 = vrot.slane %v14, %v291
    %294 = vset.pattern.permute.xlu0 0
    %295 = vperm.xlu0 %294, %v288
    %v296 = vpop.permute.xlu0 %295
    %v298 = vlaneseq
    %v299 = vshrl.u32 %v298, 7
    %v300 = vsub.s32 1, %v299
    %v301 = vrot.slane %v16, %v300
    %v302 = vmul.f32 %v296, %v301
    %v303 = vadd.f32 %v292, %v302
    %304 = vset.pattern.permute.xlu0 1
    %305 = vperm.xlu0 %304, %v288
    %v306 = vpop.permute.xlu0 %305
    %v308 = vlaneseq
    %v309 = vshrl.u32 %v308, 7
    %v310 = vsub.s32 2, %v309
    %v311 = vrot.slane %v16, %v310
    %v312 = vmul.f32 %v306, %v311
    %v313 = vadd.f32 %v303, %v312
    %314 = vset.pattern.permute.xlu0 2
    %315 = vperm.xlu0 %314, %v288
    %v316 = vpop.permute.xlu0 %315
    %v318 = vlaneseq
    %v319 = vshrl.u32 %v318, 7
    %v320 = vsub.s32 3, %v319
    %v321 = vrot.slane %v16, %v320
    %v322 = vmul.f32 %v316, %v321
    %v323 = vadd.f32 %v313, %v322
    %324 = vset.pattern.permute.xlu0 3
    %325 = vperm.xlu0 %324, %v288
    %v326 = vpop.permute.xlu0 %325
    %v328 = vlaneseq
    %v329 = vshrl.u32 %v328, 7
    %v330 = vsub.s32 4, %v329
    %v331 = vrot.slane %v16, %v330
    %v332 = vmul.f32 %v326, %v331
    %v333 = vadd.f32 %v323, %v332
    %v334 = vxor.u32 %v333, 2147483648
    %v335 = vmul.f32 %v334, 1.442695
    %v336 = vpow.pop %v335
    %v337 = vadd.f32 %v336, 1.0
    %v338 = vrcp.pop %v337
    %v339 = vmul.f32 1.0, %v338
    %v340 = vmul.f32 %v333, %v339
    %v341 = vlaneseq
    %v342 = vshrl.u32 %v341, 7
    %v343 = vsub.s32 4, %v342
    %v344 = vrot.slane %v14, %v343
    %v345 = vlaneseq
    %v346 = vshrl.u32 %v345, 7
    %v347 = vsub.s32 5, %v346
    %v348 = vrot.slane %v16, %v347
    %v349 = vmul.f32 %v192, %v348
    %v350 = vadd.f32 %v344, %v349
    %v351 = vlaneseq
    %v352 = vshrl.u32 %v351, 7
    %v353 = vsub.s32 6, %v352
    %v354 = vrot.slane %v16, %v353
    %v355 = vmul.f32 %v202, %v354
    %v356 = vadd.f32 %v350, %v355
    %v357 = vlaneseq
    %v358 = vshrl.u32 %v357, 7
    %v359 = vsub.s32 7, %v358
    %v360 = vrot.slane %v16, %v359
    %v361 = vmul.f32 %v212, %v360
    %v362 = vadd.f32 %v356, %v361
    %v363 = vlaneseq
    %v364 = vshrl.u32 %v363, 7
    %v365 = vsub.s32 0, %v364
    %v366 = vrot.slane %v17, %v365
    %v367 = vmul.f32 %v222, %v366
    %v368 = vadd.f32 %v362, %v367
    %v369 = vlaneseq
    %v370 = vshrl.u32 %v369, 7
    %v371 = vsub.s32 1, %v370
    %v372 = vrot.slane %v17, %v371
    %v373 = vmul.f32 %v244, %v372
    %v374 = vadd.f32 %v368, %v373
    %v375 = vlaneseq
    %v376 = vshrl.u32 %v375, 7
    %v377 = vsub.s32 2, %v376
    %v378 = vrot.slane %v17, %v377
    %v379 = vmul.f32 %v254, %v378
    %v380 = vadd.f32 %v374, %v379
    %v381 = vlaneseq
    %v382 = vshrl.u32 %v381, 7
    %v383 = vsub.s32 3, %v382
    %v384 = vrot.slane %v17, %v383
    %v385 = vmul.f32 %v264, %v384
    %v386 = vadd.f32 %v380, %v385
    %v387 = vlaneseq
    %v388 = vshrl.u32 %v387, 7
    %v389 = vsub.s32 4, %v388
    %v390 = vrot.slane %v17, %v389
    %v391 = vmul.f32 %v274, %v390
    %v392 = vadd.f32 %v386, %v391
    %v393 = vlaneseq
    %v394 = vshrl.u32 %v393, 7
    %v395 = vsub.s32 5, %v394
    %v396 = vrot.slane %v17, %v395
    %v397 = vmul.f32 %v296, %v396
    %v398 = vadd.f32 %v392, %v397
    %v399 = vlaneseq
    %v400 = vshrl.u32 %v399, 7
    %v401 = vsub.s32 6, %v400
    %v402 = vrot.slane %v17, %v401
    %v403 = vmul.f32 %v306, %v402
    %v404 = vadd.f32 %v398, %v403
    %v405 = vlaneseq
    %v406 = vshrl.u32 %v405, 7
    %v407 = vsub.s32 7, %v406
    %v408 = vrot.slane %v17, %v407
    %v409 = vmul.f32 %v316, %v408
    %v410 = vadd.f32 %v404, %v409
    %v411 = vlaneseq
    %v412 = vshrl.u32 %v411, 7
    %v413 = vsub.s32 0, %v412
    %v414 = vrot.slane %v18, %v413
    %v415 = vmul.f32 %v326, %v414
    %v416 = vadd.f32 %v410, %v415
    %418 = vset.pattern.permute.xlu0 0
    %419 = vperm.xlu0 %418, %v340
    %v420 = vpop.permute.xlu0 %419
    %v422 = vlaneseq
    %v423 = vshrl.u32 %v422, 7
    %v424 = vsub.s32 1, %v423
    %v425 = vrot.slane %v18, %v424
    %v426 = vmul.f32 %v420, %v425
    %v427 = vadd.f32 %v416, %v426
    %428 = vset.pattern.permute.xlu0 1
    %429 = vperm.xlu0 %428, %v340
    %v430 = vpop.permute.xlu0 %429
    %v432 = vlaneseq
    %v433 = vshrl.u32 %v432, 7
    %v434 = vsub.s32 2, %v433
    %v435 = vrot.slane %v18, %v434
    %v436 = vmul.f32 %v430, %v435
    %v437 = vadd.f32 %v427, %v436
    %438 = vset.pattern.permute.xlu0 2
    %439 = vperm.xlu0 %438, %v340
    %v440 = vpop.permute.xlu0 %439
    %v442 = vlaneseq
    %v443 = vshrl.u32 %v442, 7
    %v444 = vsub.s32 3, %v443
    %v445 = vrot.slane %v18, %v444
    %v446 = vmul.f32 %v440, %v445
    %v447 = vadd.f32 %v437, %v446
    %448 = vset.pattern.permute.xlu0 3
    %449 = vperm.xlu0 %448, %v340
    %v450 = vpop.permute.xlu0 %449
    %v452 = vlaneseq
    %v453 = vshrl.u32 %v452, 7
    %v454 = vsub.s32 4, %v453
    %v455 = vrot.slane %v18, %v454
    %v456 = vmul.f32 %v450, %v455
    %v457 = vadd.f32 %v447, %v456
    %v458 = vxor.u32 %v457, 2147483648
    %v459 = vmul.f32 %v458, 1.442695
    %v460 = vpow.pop %v459
    %v461 = vadd.f32 %v460, 1.0
    %v462 = vrcp.pop %v461
    %v463 = vmul.f32 1.0, %v462
    %v464 = vmul.f32 %v457, %v463
    %vm465 = vcmask 254976
    %466 = vst.msk [vmem:[#allocation2] sm:$0x3] %vm465, %v464
    // Predicated region
    $region10: #{multiconv_forward.1} parent=1 // pred_check
      _
    $region11: #{multiconv_forward.1} parent=1 // pred_check_branch
      %468 = sbr.rel (0) target = $region13
    $region12: #{multiconv_forward.1} parent=1 // pred_region
      %s470 = ssub.s32 32, 32
      %471 = vsyncadd [#allocation3], %s470
      %s473 = sshll.u32 [#allocation2], 4
      %s474 = int_to_ptr.vmem [resolvable:$true] %s473
      %476 = dma.vmem_to_hbm [thread:$0]  %s474, 32, %s2, [#allocation3]
    $region13: #{multiconv_forward.1} parent=1 // pred_fallthru
      _
    // Predicated region
    $region14: #{multiconv_forward.1} parent=1 // pred_check
      _
    $region15: #{multiconv_forward.1} parent=1 // pred_check_branch
      %478 = sbr.rel (0) target = $region17
    $region16: #{multiconv_forward.1} parent=1 // pred_region
      %479 = dma.done [#allocation3], 32
    $region17: #{multiconv_forward.1} parent=1 // pred_fallthru
      _
    %480 = vsyncpa [#allocation3], 1

</llo_original>
